<compile_context>
chip_gen: v7x
topology: tpu7x:2x2x1
jax: 0.10.0
libtpu: 0.0.40
codegen_flags: <defaults>
</compile_context>

<pallas_src>
import functools

import jax
import jax.numpy as jnp
import numpy as np
from jax import lax
from jax.experimental import pallas as pl
from jax.experimental.pallas import tpu as pltpu


def transition_kernel(x_ref, w_ref, b_ref, o_ref):
    """Fused 1x1-conv + 2x2 average pool over one row-pair tile.

    x_ref: (G, 2, Wo, 2*Cin)  G row-pairs; dim 1 = top/bottom row of each 2x2
                              window; last dim = the horizontal pixel pair's
                              channels [pixel(2w) ch..., pixel(2w+1) ch...].
    w_ref: (Cin, Co_p)        1x1 conv weight^T with the 0.25 pool scale folded in.
    b_ref: (1, Co_p)          conv bias (f32), added after pooling.
    o_ref: (G, Wo, Co_p)      pooled conv output.
    """
    cin = w_ref.shape[0]
    # Vertical 2-tap sum (VPU): top row + bottom row of each window.
    s = x_ref[:, 0, :, :] + x_ref[:, 1, :, :]            # (G, Wo, 2*Cin)
    # Horizontal 2-tap sum (VPU); lane-aligned whenever Cin % 128 == 0.
    # TODO(synk): if a v5e bundle audit shows bf16 pack/unpack makes VALU the
    # binding slot there, fold this pair back into the matmul ([w; w]) on v5e.
    h = s[..., :cin] + s[..., cin:]                       # (G, Wo, Cin)
    g, wo, _ = h.shape
    # TODO(synk): for Wo % 8 != 0 (DenseNet's 14/7 transitions) audit in the
    # Mosaic dump that these reshapes stay relayout-free (or pad Wo to 8).
    y = jnp.dot(h.reshape(g * wo, cin), w_ref[...],
                preferred_element_type=jnp.float32)       # MXU, f32 accumulate
    y = y + b_ref[...]                                    # bias after pooling
    o_ref[...] = y.reshape(g, wo, -1).astype(o_ref.dtype)


def _round_up(v, m):
    return (v + m - 1) // m * m


def _choose_tiling(num_pairs, in_pair_bytes, out_pair_bytes, fixed_bytes, *,
                   live_budget_bytes=14 << 20, min_steps=4):
    """Pick the row-pair tile G and the (possibly padded) row-pair count.

    Accounts for what is actually VMEM-resident: double-buffered input and
    output tiles plus the single-fetch weight/bias.  Prefers >= min_steps grid
    steps with an even count so v7x's two TensorCores split the grid evenly,
    and pads num_pairs up to a multiple of G instead of hunting for divisors.
    """
    per_pair = 2 * (in_pair_bytes + out_pair_bytes)       # double-buffered
    avail = max(live_budget_bytes - fixed_bytes, per_pair)
    g = max(1, min(num_pairs, avail // per_pair))
    if num_pairs >= min_steps:
        g = min(g, pl.cdiv(num_pairs, min_steps))
    steps = pl.cdiv(num_pairs, g)
    if steps > 1 and steps % 2 == 1:
        # Shrink the tile slightly if that yields an even step count (cheaper
        # than padding a whole empty grid step, which would hurt v5e/v6e).
        g_alt = pl.cdiv(num_pairs, steps + 1)
        steps_alt = pl.cdiv(num_pairs, g_alt)
        if steps_alt % 2 == 0:
            g, steps = g_alt, steps_alt
    return g, steps, g * steps


@functools.partial(jax.jit, static_argnames=("compute_dtype", "out_dtype"))
def transition_block_nhwc(x_nhwc, w, b, *, compute_dtype=jnp.bfloat16,
                          out_dtype=None):
    """NHWC fast path: x_nhwc (N, H, W, Cin), w (Cout, Cin, 1, 1), b (Cout,)
       -> (N, H//2, W//2, Cout) == AvgPool2d(2,2)(Conv2d 1x1(x))."""
    N, H, W, Cin = x_nhwc.shape
    Cout = w.shape[0]
    Ho, Wo = H // 2, W // 2
    out_dtype = x_nhwc.dtype if out_dtype is None else out_dtype

    # AvgPool2d floor semantics: drop a trailing odd row/column.
    if H != 2 * Ho or W != 2 * Wo:
        x_nhwc = x_nhwc[:, : 2 * Ho, : 2 * Wo, :]

    # Free row-major reinterpretation: (N*Ho, 2, Wo, 2*Cin); the cast fuses
    # with its producer (transpose / previous layer) under jit.
    x_pairs = x_nhwc.reshape(N * Ho, 2, Wo, 2 * Cin).astype(compute_dtype)

    # Weight: (Cout, Cin, 1, 1) -> (Cin, Cout) with the 0.25 pool scale folded
    # in; Cout padded to a lane-dense multiple of 128 (no-op for DenseNet).
    Co_p = _round_up(Cout, 128)
    wmat = (w.reshape(Cout, Cin).T * 0.25).astype(compute_dtype)
    bvec = b.astype(jnp.float32).reshape(1, Cout)
    if Co_p != Cout:
        wmat = jnp.pad(wmat, ((0, 0), (0, Co_p - Cout)))
        bvec = jnp.pad(bvec, ((0, 0), (0, Co_p - Cout)))

    num_pairs = N * Ho
    csize = jnp.dtype(compute_dtype).itemsize
    in_pair_bytes = 2 * Wo * 2 * Cin * csize
    out_pair_bytes = Wo * Co_p * jnp.dtype(out_dtype).itemsize
    fixed_bytes = wmat.size * csize + bvec.size * 4
    G, steps, padded_pairs = _choose_tiling(
        num_pairs, in_pair_bytes, out_pair_bytes, fixed_bytes)
    if padded_pairs != num_pairs:
        x_pairs = jnp.pad(
            x_pairs, ((0, padded_pairs - num_pairs), (0, 0), (0, 0), (0, 0)))

    out = pl.pallas_call(
        transition_kernel,
        out_shape=jax.ShapeDtypeStruct((padded_pairs, Wo, Co_p), out_dtype),
        grid_spec=pltpu.PrefetchScalarGridSpec(
            num_scalar_prefetch=0,
            grid=(steps,),
            in_specs=[
                pl.BlockSpec((G, 2, Wo, 2 * Cin), lambda t: (t, 0, 0, 0)),
                # Constant index_map -> fetched once and kept resident.
                # TODO(synk): mark weight/bias pipeline_mode=pl.Buffered(1) to
                # drop their second buffer once verified on the target Mosaic rev.
                pl.BlockSpec((Cin, Co_p), lambda t: (0, 0)),
                pl.BlockSpec((1, Co_p), lambda t: (0, 0)),
            ],
            out_specs=pl.BlockSpec((G, Wo, Co_p), lambda t: (t, 0, 0)),
        ),
        compiler_params=pltpu.CompilerParams(
            dimension_semantics=("parallel",),
            vmem_limit_bytes=48 * 1024 * 1024),
    )(x_pairs, wmat, bvec)

    out = out[:num_pairs].reshape(N, Ho, Wo, Co_p)
    if Co_p != Cout:
        out = out[..., :Cout]
    return out


@functools.partial(jax.jit, static_argnames=("compute_dtype", "out_dtype"))
def transition_block(x_nchw, w, b, *, compute_dtype=jnp.bfloat16,
                     out_dtype=None):
    """NCHW interface matching the PyTorch module.

    TODO(synk): keep activations NHWC end-to-end across the network (call
    transition_block_nhwc directly) so these transposes leave the hot path;
    under jit they at least fuse with the cast / output slice into one pass
    each instead of separate HBM round-trips.
    """
    x_nhwc = jnp.transpose(x_nchw, (0, 2, 3, 1))          # (N, H, W, Cin)
    out = transition_block_nhwc(x_nhwc, w, b, compute_dtype=compute_dtype,
                                out_dtype=out_dtype)
    return jnp.transpose(out, (0, 3, 1, 2))               # back to NCHW


if __name__ == "__main__":
    key = jax.random.PRNGKey(0)
    kx, kw, kb = jax.random.split(key, 3)

    N, Cin, Cout, H, W = 2, 4, 8, 16, 16
    x = jax.random.normal(kx, (N, Cin, H, W), dtype=jnp.float32)

    # Deterministic init matching nn.Conv2d default: U(-k, k), k = 1/sqrt(Cin)
    bound = 1.0 / np.sqrt(Cin)
    w = jax.random.uniform(kw, (Cout, Cin, 1, 1), minval=-bound, maxval=bound,
                           dtype=jnp.float32)
    b = jax.random.uniform(kb, (Cout,), minval=-bound, maxval=bound,
                           dtype=jnp.float32)

    # Plain-JAX reference (same math as the PyTorch module), f32.
    ref = lax.conv_general_dilated(
        x, w, window_strides=(1, 1), padding="VALID",
        dimension_numbers=("NCHW", "OIHW", "NCHW")) + b.reshape(1, Cout, 1, 1)
    ref = lax.reduce_window(ref, 0.0, lax.add,
                            (1, 1, 2, 2), (1, 1, 2, 2), "VALID") / 4.0
    ref = np.asarray(ref)

    # 1) f32 compute path: proves the fused pool-into-matmul algorithm.
    out_f32 = jax.block_until_ready(
        transition_block(x, w, b, compute_dtype=jnp.float32))
    assert out_f32.shape == (N, Cout, H // 2, W // 2)
    np.testing.assert_allclose(np.asarray(out_f32), ref, atol=1e-4, rtol=1e-4)

    # 2) Default optimized bf16 data path (f32 MXU accumulation).
    out = jax.block_until_ready(transition_block(x, w, b))
    assert out.shape == (N, Cout, H // 2, W // 2)
    np.testing.assert_allclose(np.asarray(out), ref, atol=7e-2, rtol=7e-2)

    # 3) NHWC-resident fast path (no wrapper transposes around the kernel).
    x_nhwc = jnp.transpose(x, (0, 2, 3, 1))
    out_nhwc = jax.block_until_ready(transition_block_nhwc(x_nhwc, w, b))
    assert out_nhwc.shape == (N, H // 2, W // 2, Cout)
    np.testing.assert_allclose(
        np.transpose(np.asarray(out_nhwc), (0, 3, 1, 2)), ref,
        atol=7e-2, rtol=7e-2)

    print("KERNEL_OK")
</pallas_src>

<mosaic_0001>
module attributes {stable_mosaic.version = 11 : i64} {
  func.func @transition_kernel(%arg0: i32, %arg1: memref<4x2x8x8xf32, #tpu.memory_space<vmem>>, %arg2: memref<4x128xf32, #tpu.memory_space<vmem>>, %arg3: memref<1x128xf32, #tpu.memory_space<vmem>>, %arg4: memref<4x8x128xf32, #tpu.memory_space<vmem>>) attributes {dimension_semantics = [#tpu.dimension_semantics<parallel>], iteration_bounds = array<i64: 4>, scalar_prefetch = 0 : i64, scratch_operands = 0 : i64, tpu.core_type = #tpu.core_type<tc>, window_params = [{transform_indices = @transform_0, window_bounds = array<i64: 4, 2, 8, 8>}, {pipeline_mode = #tpu.pipeline_mode<synchronous>, transform_indices = @transform_1, window_bounds = array<i64: 4, 128>}, {pipeline_mode = #tpu.pipeline_mode<synchronous>, transform_indices = @transform_2, window_bounds = array<i64: 1, 128>}, {transform_indices = @transform_3, window_bounds = array<i64: 4, 8, 128>}]} {
    %c0 = arith.constant 0 : index
    %c0_0 = arith.constant 0 : index
    %c0_1 = arith.constant 0 : index
    %c0_2 = arith.constant 0 : index
    %0 = vector.load %arg1[%c0, %c0_0, %c0_1, %c0_2] : memref<4x2x8x8xf32, #tpu.memory_space<vmem>>, vector<4x1x8x8xf32>
    %1 = vector.shape_cast %0 : vector<4x1x8x8xf32> to vector<4x8x8xf32>
    %c0_3 = arith.constant 0 : index
    %c1 = arith.constant 1 : index
    %c0_4 = arith.constant 0 : index
    %c0_5 = arith.constant 0 : index
    %2 = vector.load %arg1[%c0_3, %c1, %c0_4, %c0_5] : memref<4x2x8x8xf32, #tpu.memory_space<vmem>>, vector<4x1x8x8xf32>
    %3 = vector.shape_cast %2 : vector<4x1x8x8xf32> to vector<4x8x8xf32>
    %4 = arith.addf %1, %3 : vector<4x8x8xf32>
    %5 = vector.extract_strided_slice %4 {offsets = [0, 0, 0], sizes = [4, 8, 4], strides = [1, 1, 1]} : vector<4x8x8xf32> to vector<4x8x4xf32>
    %6 = vector.extract_strided_slice %4 {offsets = [0, 0, 4], sizes = [4, 8, 4], strides = [1, 1, 1]} : vector<4x8x8xf32> to vector<4x8x4xf32>
    %7 = arith.addf %5, %6 : vector<4x8x4xf32>
    %8 = vector.shape_cast %7 : vector<4x8x4xf32> to vector<32x4xf32>
    %c0_6 = arith.constant 0 : index
    %c0_7 = arith.constant 0 : index
    %9 = vector.load %arg2[%c0_6, %c0_7] : memref<4x128xf32, #tpu.memory_space<vmem>>, vector<4x128xf32>
    %cst = arith.constant dense<0.000000e+00> : vector<32x128xf32>
    %10 = tpu.matmul %8, %9, %cst {dimension_numbers = #tpu.dot_dimension_numbers<[1], [0], [0], [1], [0, 0, 1, 1], [], []>} : vector<32x4xf32>, vector<4x128xf32>, vector<32x128xf32> -> vector<32x128xf32>
    %c0_8 = arith.constant 0 : index
    %c0_9 = arith.constant 0 : index
    %11 = vector.load %arg3[%c0_8, %c0_9] : memref<1x128xf32, #tpu.memory_space<vmem>>, vector<1x128xf32>
    %12 = vector.broadcast %11 : vector<1x128xf32> to vector<32x128xf32>
    %13 = arith.addf %10, %12 : vector<32x128xf32>
    %14 = vector.shape_cast %13 : vector<32x128xf32> to vector<4x8x128xf32>
    %c0_10 = arith.constant 0 : index
    %c0_11 = arith.constant 0 : index
    %c0_12 = arith.constant 0 : index
    %15 = vector.load %arg4[%c0_10, %c0_11, %c0_12] : memref<4x8x128xf32, #tpu.memory_space<vmem>>, vector<4x8x128xf32>
    tpu.vector_store %arg4[%c0_10, %c0_11, %c0_12], %14 {strides = array<i32>} : memref<4x8x128xf32, #tpu.memory_space<vmem>>, vector<4x8x128xf32>,
    return
  }
  func.func @transform_0(%arg0: i32) -> (i32, i32, i32, i32) {
    %c0_i32 = arith.constant 0 : i32
    %c0_i32_0 = arith.constant 0 : i32
    %c0_i32_1 = arith.constant 0 : i32
    %c0_i32_2 = arith.constant 0 : i32
    return %arg0, %c0_i32, %c0_i32_0, %c0_i32_1 : i32, i32, i32, i32
  }
  func.func @transform_1(%arg0: i32) -> (i32, i32) {
    %c0_i32 = arith.constant 0 : i32
    %c0_i32_0 = arith.constant 0 : i32
    %c0_i32_1 = arith.constant 0 : i32
    return %c0_i32, %c0_i32_0 : i32, i32
  }
  func.func @transform_2(%arg0: i32) -> (i32, i32) {
    %c0_i32 = arith.constant 0 : i32
    %c0_i32_0 = arith.constant 0 : i32
    %c0_i32_1 = arith.constant 0 : i32
    return %c0_i32, %c0_i32_0 : i32, i32
  }
  func.func @transform_3(%arg0: i32) -> (i32, i32, i32) {
    %c0_i32 = arith.constant 0 : i32
    %c0_i32_0 = arith.constant 0 : i32
    %c0_i32_1 = arith.constant 0 : i32
    return %arg0, %c0_i32, %c0_i32_0 : i32, i32, i32
  }
}

</mosaic_0001>

<llo_original>
// kernel: transition_block_nhwc.1
$region0: #{transition_block_nhwc.1}
  #allocation0 [shape = 'u32[]', space=smem, size = 0x4, offset = 0x4, fixed_abs, tag = 'smem constant byte address 0x4 - core index']
  #allocation1 [shape = 'u32[144,128]{1,0:T(1,128)}', space=vmem, size = 0x12000, scoped, tag = 'internal scratch']
  %s0 = inlined_call_operand.vmem [shape: f32[16,2,8,8], index: 0, kind: input, shape index: {}]
  %s1 = inlined_call_operand.vmem [shape: f32[4,128], index: 1, kind: input, shape index: {}]
  %s2 = inlined_call_operand.vmem [shape: f32[1,128], index: 2, kind: input, shape index: {}]
  %s3 = inlined_call_operand.hbm [shape: f32[16,8,128], index: 3, kind: output, shape index: {}]
  %s4 = sld [smem:[#allocation0]]
  $region45: #{transition_block_nhwc.1} parent=0
    _
  %s6 = ssub.s32 1, %s4
  %s7 = scalar_select 0, %s6, %s4
  $region1: #{transition_block_nhwc.1} parent=0
    #allocation2 [shape = 'u8[32768]{0}', space=vmem, size = 0x8000, scoped, tag = 'output window, operand 0']
    #allocation3 [shape = 's32[2]{0}', space=sflag, size = 0x8, scoped, tag = 'scoped memory for transition_block_nhwc.1']
    %8 = vsyncpa [#allocation3], 0
    %s9 = scalar_lea.sflag [#allocation3], 1
    %10 = vsyncpa %s9, 0
    loop: start=0, step=1, limit=6
    $region2: #{transition_block_nhwc.1} parent=1 // loop_pre_header
      _
    $region3: #{transition_block_nhwc.1} parent=1 // loop_header
      %s12 = sphi 0, %s16
      %p13 = scmp.ge.s32.totalorder %s12, 6
      %s22 = sphi 0, %s24
      %s25 = sphi 0, %s22
      %s26 = sphi 0, %s25
      %s42 = sphi 0, %s26
      %s46 = sphi 0, %s46
      %s48 = sphi 0, %s46
      %s49 = sphi 0, %s48
      %s63 = sphi 0, %s49
      %s67 = sphi 0, %s67
      %s69 = sphi 0, %s67
      %s70 = sphi 0, %s69
      %s84 = sphi 0, %s70
      %s90 = sphi 0, %s92
      %s93 = sphi 0, %s90
      %s94 = sphi 0, %s93
      %s110 = sphi 0, %s94
    $region4: #{transition_block_nhwc.1} parent=1 // loop_header_branch
      %15 = sbr.rel (%p13) target = $region8
    $region5: #{transition_block_nhwc.1} parent=1 // loop_body
      %s17 = ssub.s32 %s12, 1
      %s18 = ssub.s32 %s12, 2
      %s19 = sadd.s32 %s12, 1
      %s20 = ssub.s32 %s12, %s19
      %p21 = scmp.eq.s32.totalorder %s20, 0
      %s23 = sadd.s32 %s22, 1
      %s24 = scalar_select %p21, %s22, %s23
      %p27 = pneg %p21
      %p28 = scmp.eq.s32.totalorder %s12, 3
      %p29 = por %p27, %p28
      %p30 = scmp.ne.s32.totalorder %s22, %s25
      %p31 = scmp.eq.s32.totalorder %s12, 0
      %p32 = por %p30, %p31
      %p33 = scmp.ne.s32.totalorder %s22, %s25
      %p34 = scmp.eq.s32.totalorder %s17, 3
      %p35 = por %p33, %p34
      %p36 = scmp.ne.s32.totalorder %s25, %s26
      %p37 = scmp.eq.s32.totalorder %s17, 0
      %p38 = por %p36, %p37
      %p39 = scmp.ne.s32.totalorder %s25, %s26
      %p40 = scmp.eq.s32.totalorder %s18, 3
      %p41 = por %p39, %p40
      %p43 = scmp.ne.s32.totalorder %s26, %s42
      %p44 = scmp.eq.s32.totalorder %s18, 0
      %p45 = por %p43, %p44
      %s47 = sadd.s32 %s46, 1
      %p50 = scmp.eq.s32.totalorder %s12, 3
      %p51 = scmp.ne.s32.totalorder %s46, %s48
      %p52 = scmp.eq.s32.totalorder %s12, 0
      %p53 = por %p51, %p52
      %p54 = scmp.ne.s32.totalorder %s46, %s48
      %p55 = scmp.eq.s32.totalorder %s17, 3
      %p56 = por %p54, %p55
      %p57 = scmp.ne.s32.totalorder %s48, %s49
      %p58 = scmp.eq.s32.totalorder %s17, 0
      %p59 = por %p57, %p58
      %p60 = scmp.ne.s32.totalorder %s48, %s49
      %p61 = scmp.eq.s32.totalorder %s18, 3
      %p62 = por %p60, %p61
      %p64 = scmp.ne.s32.totalorder %s49, %s63
      %p65 = scmp.eq.s32.totalorder %s18, 0
      %p66 = por %p64, %p65
      %s68 = sadd.s32 %s67, 1
      %p71 = scmp.eq.s32.totalorder %s12, 3
      %p72 = scmp.ne.s32.totalorder %s67, %s69
      %p73 = scmp.eq.s32.totalorder %s12, 0
      %p74 = por %p72, %p73
      %p75 = scmp.ne.s32.totalorder %s67, %s69
      %p76 = scmp.eq.s32.totalorder %s17, 3
      %p77 = por %p75, %p76
      %p78 = scmp.ne.s32.totalorder %s69, %s70
      %p79 = scmp.eq.s32.totalorder %s17, 0
      %p80 = por %p78, %p79
      %p81 = scmp.ne.s32.totalorder %s69, %s70
      %p82 = scmp.eq.s32.totalorder %s18, 3
      %p83 = por %p81, %p82
      %p85 = scmp.ne.s32.totalorder %s70, %s84
      %p86 = scmp.eq.s32.totalorder %s18, 0
      %p87 = por %p85, %p86
      %s88 = ssub.s32 %s12, %s19
      %p89 = scmp.eq.s32.totalorder %s88, 0
      %s91 = sadd.s32 %s90, 1
      %s92 = scalar_select %p89, %s90, %s91
      %p95 = pneg %p89
      %p96 = scmp.eq.s32.totalorder %s12, 3
      %p97 = por %p95, %p96
      %p98 = scmp.ne.s32.totalorder %s90, %s93
      %p99 = scmp.eq.s32.totalorder %s12, 0
      %p100 = por %p98, %p99
      %p101 = scmp.ne.s32.totalorder %s90, %s93
      %p102 = scmp.eq.s32.totalorder %s17, 3
      %p103 = por %p101, %p102
      %p104 = scmp.ne.s32.totalorder %s93, %s94
      %p105 = scmp.eq.s32.totalorder %s17, 0
      %p106 = por %p104, %p105
      %p107 = scmp.ne.s32.totalorder %s93, %s94
      %p108 = scmp.eq.s32.totalorder %s18, 3
      %p109 = por %p107, %p108
      %p111 = scmp.ne.s32.totalorder %s94, %s110
      %p112 = scmp.eq.s32.totalorder %s18, 0
      %p113 = por %p111, %p112
      %p114 = scmp.le.s32.totalorder 1, %s12
      %p115 = scmp.lt.s32.totalorder %s12, 5
      %p116 = pnand %p114, %p115
      %p117 = pneg %p116
      // Predicated region
      $region9: #{transition_block_nhwc.1} parent=5 // pred_check
        _
      $region10: #{transition_block_nhwc.1} parent=5 // pred_check_branch
        %119 = sbr.rel (%p116) target = $region12
      $region11: #{transition_block_nhwc.1} parent=5 // pred_region
        %s120 = ssub.s32 %s12, 1
        // Predicated region
        $region13: #{transition_block_nhwc.1} parent=11 // pred_check
          %p121 = pneg %p59
        $region14: #{transition_block_nhwc.1} parent=11 // pred_check_branch
          %123 = sbr.rel (%p121) target = $region16
        $region15: #{transition_block_nhwc.1} parent=11 // pred_region
          _
        $region16: #{transition_block_nhwc.1} parent=11 // pred_fallthru
          _
        // Predicated region
        $region17: #{transition_block_nhwc.1} parent=11 // pred_check
          %p124 = pneg %p80
        $region18: #{transition_block_nhwc.1} parent=11 // pred_check_branch
          %126 = sbr.rel (%p124) target = $region20
        $region19: #{transition_block_nhwc.1} parent=11 // pred_region
          _
        $region20: #{transition_block_nhwc.1} parent=11 // pred_fallthru
          _
      $region12: #{transition_block_nhwc.1} parent=5 // pred_fallthru
        _
      %p127 = scmp.lt.s32.totalorder %s12, 4
      // Predicated region
      $region21: #{transition_block_nhwc.1} parent=5 // pred_check
        %p128 = pneg %p127
      $region22: #{transition_block_nhwc.1} parent=5 // pred_check_branch
        %130 = sbr.rel (%p128) target = $region24
      $region23: #{transition_block_nhwc.1} parent=5 // pred_region
        // Predicated region
        $region25: #{transition_block_nhwc.1} parent=23 // pred_check
          %p131 = pneg %p32
        $region26: #{transition_block_nhwc.1} parent=23 // pred_check_branch
          %133 = sbr.rel (%p131) target = $region28
        $region27: #{transition_block_nhwc.1} parent=23 // pred_region
          %s134 = smul.u32 4, %s12
          %p135 = scmp.lt.s32.totalorder %s134, 15
          %s136 = scalar_select %p135, %s134, 15
          %s137 = smul.addr %s136, 2
          %s138 = smul.addr %s137, 8
          %s139 = scalar_lea.vmem %s0, %s138
          %s140 = smul.u32 4, %s12
        $region28: #{transition_block_nhwc.1} parent=23 // pred_fallthru
          _
      $region24: #{transition_block_nhwc.1} parent=5 // pred_fallthru
        _
      %p141 = scmp.le.s32.totalorder 1, %s12
      %p142 = scmp.lt.s32.totalorder %s12, 5
      %p143 = pnand %p141, %p142
      %p144 = pneg %p143
      // Predicated region
      $region29: #{transition_block_nhwc.1} parent=5 // pred_check
        _
      $region30: #{transition_block_nhwc.1} parent=5 // pred_check_branch
        %146 = sbr.rel (%p143) target = $region32
      $region31: #{transition_block_nhwc.1} parent=5 // pred_region
        %s147 = ssub.s32 %s12, 1
        %s148 = smul.u32 4, %s17
        %p149 = scmp.lt.s32.totalorder %s148, 15
        %s150 = scalar_select %p149, %s148, 15
        %s151 = smul.addr %s150, 2
        %s152 = smul.addr %s151, 8
        %s153 = scalar_lea.vmem %s0, %s152
        %p154 = pneg %p38
        %p155 = pneg %p35
        %p156 = pneg %p59
        %p157 = pneg %p56
        %p158 = pneg %p80
        %p159 = pneg %p77
        %p160 = pneg %p106
        %p161 = pneg %p103
        %s162 = sand.u32 %s93, 1
        %s163 = scalar_lea.sflag [#allocation3], %s162
        %s164 = sand.u32 %s93, 1
        %s165 = smul.addr %s164, 32
        %s166 = scalar_lea.vmem [#allocation2], %s165
        %s167 = smul.u32 4, %s17
        %p168 = scmp.lt.s32.totalorder %s167, 15
        %s169 = scalar_select %p168, %s167, 15
        %s170 = smul.addr %s169, 2
        %s171 = smul.addr %s170, 8
        %s172 = scalar_lea.vmem %s0, %s171
        %s173 = smul.u32 4, %s17
        %s174 = smul.u32 4, %s17
        %v175 = vld [vmem:[%s172] sm:$0xff]
        %v176 = vld [vmem:[%s172 + $0x10] sm:$0xff]
        %v177 = vld [vmem:[%s172 + $0x20] sm:$0xff]
        %v178 = vld [vmem:[%s172 + $0x30] sm:$0xff]
        %s179 = scalar_lea.vmem %s172, 8
        %v180 = vld [vmem:[%s179] sm:$0xff]
        %v181 = vld [vmem:[%s179 + $0x10] sm:$0xff]
        %v182 = vld [vmem:[%s179 + $0x20] sm:$0xff]
        %v183 = vld [vmem:[%s179 + $0x30] sm:$0xff]
        %v184 = vadd.f32 %v175, %v180
        %v185 = vadd.f32 %v176, %v181
        %v186 = vadd.f32 %v177, %v182
        %v187 = vadd.f32 %v178, %v183
        %192 = vrot.lane.b32.xlu0 %v184, 124
        %v193 = vpop.permute.xlu0 %192
        %194 = vrot.lane.b32.xlu0 %v185, 124
        %v195 = vpop.permute.xlu0 %194
        %196 = vrot.lane.b32.xlu0 %v186, 124
        %v197 = vpop.permute.xlu0 %196
        %198 = vrot.lane.b32.xlu0 %v187, 124
        %v199 = vpop.permute.xlu0 %198
        %v204 = vadd.f32 %v184, %v193
        %v205 = vadd.f32 %v185, %v195
        %v206 = vadd.f32 %v186, %v197
        %v207 = vadd.f32 %v187, %v199
        %v208 = vld [vmem:[%s1] sm:$0xf]
        %v209 = vld [vmem:[%s2] sm:$0x1]
        %v211 = vlaneseq
        %v212 = vshrl.u32 %v211, 7
        %v213 = vsub.s32 0, %v212
        %v214 = vrot.slane %v209, %v213
        %vm216 = vcmask 31744
        %v218 = vsel %vm216, %v204, 0
        %v221 = vsel %vm216, %v205, 0
        %v224 = vsel %vm216, %v206, 0
        %v227 = vsel %vm216, %v207, 0
        %vm229 = vcmask 1043456
        %v231 = vsel %vm229, %v208, 0
        %233 = vmatprep.subr.mxu0 0.0
        %234 = vmatpush1.msra.mxu0 %v231
        %235 = vmatprep.subr.mxu0 0.0
        %236 = vmatpush1.msra.mxu0 0.0
        %237 = vmatprep.subr.mxu0 0.0
        %238 = vmatpush1.msra.mxu0 0.0
        %239 = vmatprep.subr.mxu0 0.0
        %240 = vmatpush1.msra.mxu0 0.0
        %241 = vmatprep.subr.mxu0 0.0
        %242 = vmatpush1.msra.mxu0 0.0
        %243 = vmatprep.subr.mxu0 0.0
        %244 = vmatpush1.msra.mxu0 0.0
        %245 = vmatprep.subr.mxu0 0.0
        %246 = vmatpush1.msra.mxu0 0.0
        %247 = vmatprep.subr.mxu0 0.0
        %248 = vmatpush1.msra.mxu0 0.0
        %249 = vmatprep.subr.mxu0 0.0
        %250 = vmatpush1.msra.mxu0 0.0
        %251 = vmatprep.subr.mxu0 0.0
        %252 = vmatpush1.msra.mxu0 0.0
        %253 = vmatprep.subr.mxu0 0.0
        %254 = vmatpush1.msra.mxu0 0.0
        %255 = vmatprep.subr.mxu0 0.0
        %256 = vmatpush1.msra.mxu0 0.0
        %257 = vmatprep.subr.mxu0 0.0
        %258 = vmatpush1.msra.mxu0 0.0
        %259 = vmatprep.subr.mxu0 0.0
        %260 = vmatpush1.msra.mxu0 0.0
        %261 = vmatprep.subr.mxu0 0.0
        %262 = vmatpush1.msra.mxu0 0.0
        %263 = vmatprep.subr.mxu0 0.0
        %264 = vmatpush1.msra.mxu0 0.0
        %265 = vmatprep.subr.mxu0 0.0
        %266 = vmatpush1.msra.mxu0 0.0
        %267 = vmatprep.subr.mxu0 0.0
        %268 = vmatpush1.msra.mxu0 0.0
        %269 = vmatprep.subr.mxu0 0.0
        %270 = vmatpush1.msra.mxu0 0.0
        %271 = vmatprep.subr.mxu0 0.0
        %272 = vmatpush1.msra.mxu0 0.0
        %273 = vmatprep.subr.mxu0 0.0
        %274 = vmatpush1.msra.mxu0 0.0
        %275 = vmatprep.subr.mxu0 0.0
        %276 = vmatpush1.msra.mxu0 0.0
        %277 = vmatprep.subr.mxu0 0.0
        %278 = vmatpush1.msra.mxu0 0.0
        %279 = vmatprep.subr.mxu0 0.0
        %280 = vmatpush1.msra.mxu0 0.0
        %281 = vmatprep.subr.mxu0 0.0
        %282 = vmatpush1.msra.mxu0 0.0
        %283 = vmatprep.subr.mxu0 0.0
        %284 = vmatpush1.msra.mxu0 0.0
        %285 = vmatprep.subr.mxu0 0.0
        %286 = vmatpush1.msra.mxu0 0.0
        %287 = vmatprep.subr.mxu0 0.0
        %288 = vmatpush1.msra.mxu0 0.0
        %289 = vmatprep.subr.mxu0 0.0
        %290 = vmatpush1.msra.mxu0 0.0
        %291 = vmatprep.subr.mxu0 0.0
        %292 = vmatpush1.msra.mxu0 0.0
        %293 = vmatprep.subr.mxu0 0.0
        %294 = vmatpush1.msra.mxu0 0.0
        %295 = vmatprep.subr.mxu0 0.0
        %296 = vmatpush1.msra.mxu0 0.0
        %297 = vmatprep.mubr.f32.mxu0 0.0
        %298 = vmatmul.mubr.f32.gmra.mrb[0].mxu0 %v218
        %v299 = vpop.f32.mrb[0].mxu0
        %v300 = vadd.f32 %v214, %v299
        %v301 = vpop.f32.mrb[0].mxu0
        %302 = vmatprep.mubr.f32.mxu0 0.0
        %303 = vmatmul.mubr.f32.gmra.mrb[0].mxu0 %v221
        %v304 = vpop.f32.mrb[0].mxu0
        %v305 = vadd.f32 %v214, %v304
        %v306 = vpop.f32.mrb[0].mxu0
        %307 = vmatprep.mubr.f32.mxu0 0.0
        %308 = vmatmul.mubr.f32.gmra.mrb[0].mxu0 %v224
        %v309 = vpop.f32.mrb[0].mxu0
        %v310 = vadd.f32 %v214, %v309
        %v311 = vpop.f32.mrb[0].mxu0
        %312 = vmatprep.mubr.f32.mxu0 0.0
        %313 = vmatmul.mubr.f32.gmra.mrb[0].mxu0 %v227
        %v314 = vpop.f32.mrb[0].mxu0
        %v315 = vadd.f32 %v214, %v314
        %v316 = vpop.f32.mrb[0].mxu0
        %317 = vdwg.mxu0
        %318 = vst [vmem:[%s166] sm:$0xff] %v300
        %319 = vst [vmem:[%s166 + $0x8] sm:$0xff] %v305
        %320 = vst [vmem:[%s166 + $0x10] sm:$0xff] %v310
        %321 = vst [vmem:[%s166 + $0x18] sm:$0xff] %v315
        %s322 = sand.u32 %s93, 1
        %s323 = scalar_lea.sflag [#allocation3], %s322
        %s324 = sand.u32 %s93, 1
        %s325 = smul.addr %s324, 32
        %s326 = scalar_lea.vmem [#allocation2], %s325
        // Predicated region
        $region33: #{transition_block_nhwc.1} parent=31 // pred_check
          %p327 = pneg %p103
        $region34: #{transition_block_nhwc.1} parent=31 // pred_check_branch
          %329 = sbr.rel (%p327) target = $region36
        $region35: #{transition_block_nhwc.1} parent=31 // pred_region
          %s330 = smul.u32 4, %s17
          %s332 = ssub.s32 512, 512
          %333 = vsyncadd %s323, %s332
          %s334 = smul.addr %s330, 128
          %s335 = scalar_lea.hbm %s3, %s334
          %s336 = sshll.u32 %s326, 4
          %s337 = int_to_ptr.vmem [resolvable:$true] %s336
          %342 = dma.vmem_to_hbm [thread:$0]  %s337, 512, %s335, %s323, 128, 128, 8
        $region36: #{transition_block_nhwc.1} parent=31 // pred_fallthru
          _
      $region32: #{transition_block_nhwc.1} parent=5 // pred_fallthru
        _
      %p343 = scmp.le.s32.totalorder 2, %s12
      // Predicated region
      $region37: #{transition_block_nhwc.1} parent=5 // pred_check
        %p344 = pneg %p343
      $region38: #{transition_block_nhwc.1} parent=5 // pred_check_branch
        %346 = sbr.rel (%p344) target = $region40
      $region39: #{transition_block_nhwc.1} parent=5 // pred_region
        %s347 = ssub.s32 %s12, 2
        // Predicated region
        $region41: #{transition_block_nhwc.1} parent=39 // pred_check
          %p348 = pneg %p109
        $region42: #{transition_block_nhwc.1} parent=39 // pred_check_branch
          %350 = sbr.rel (%p348) target = $region44
        $region43: #{transition_block_nhwc.1} parent=39 // pred_region
          %s351 = sand.u32 %s94, 1
          %s352 = scalar_lea.sflag [#allocation3], %s351
          %s353 = sand.u32 %s94, 1
          %s354 = smul.addr %s353, 32
          %s355 = scalar_lea.vmem [#allocation2], %s354
          %356 = dma.done %s352, 512
        $region44: #{transition_block_nhwc.1} parent=39 // pred_fallthru
          _
      $region40: #{transition_block_nhwc.1} parent=5 // pred_fallthru
        _
    $region6: #{transition_block_nhwc.1} parent=1 // loop_footer
      %s16 = sadd.s32 1, %s12
    $region7: #{transition_block_nhwc.1} parent=1 // loop_footer_branch
      %11 = sbr.rel target = $region3
    $region8: #{transition_block_nhwc.1} parent=1 // loop_exit
      _
    %357 = vsyncpa [#allocation3], 1
    %s358 = scalar_lea.sflag [#allocation3], 1
    %359 = vsyncpa %s358, 1

</llo_original>
